<compile_context>
chip_gen: v6e
topology: v6e:2x2x1
jax: 0.10.0
libtpu: 0.0.40
codegen_flags: <defaults>
</compile_context>

<pallas_src>
import functools
import math

import jax
import jax.numpy as jnp
from jax.experimental import pallas as pl
from jax.experimental.pallas import tpu as pltpu


# ----------------------------------------------------------------------------
# VMEM budgeting (generation-aware)
# ----------------------------------------------------------------------------
def _physical_vmem_bytes():
    # v5e/v6e: 128 MiB per TensorCore, v7x: 64 MiB. Fall back conservatively.
    try:
        info = pltpu.get_tpu_info()
        for attr in ("vmem_capacity_bytes", "vmem_size_bytes", "vmem_bytes"):
            v = getattr(info, attr, None)
            if v:
                return int(v)
    except Exception:
        pass
    return 64 << 20


@functools.lru_cache(maxsize=1)
def _vmem_limit_bytes():
    cap = _physical_vmem_bytes()
    # Leave headroom for Mosaic internal scratch: 48 MiB on v7x, 96 MiB on v5e/v6e.
    return int(min(cap * 3 // 4, 112 << 20))


def _compiler_params(n_parallel_axes=1):
    return pltpu.CompilerParams(
        dimension_semantics=("parallel",) * n_parallel_axes,
        vmem_limit_bytes=_vmem_limit_bytes(),
    )


def _round_up(x, m):
    return ((x + m - 1) // m) * m


def _choose_tile_rows(rows, *, per_row_bytes, fixed_bytes, itemsize,
                      max_tile_rows=2048):
    """Largest row tile whose full VMEM footprint fits the budget.

    `per_row_bytes` must include the double-buffered row-tiled I/O *and* the
    in-kernel f32 working set; `fixed_bytes` covers resident (constant-index)
    weights/biases. The tile is capped so the row grid keeps >= 2 steps where
    possible (v7x has 2 TensorCores and the row axis is marked "parallel").
    """
    align = 16 if itemsize == 2 else 8            # sublane packing (bf16: 16)
    budget = _vmem_limit_bytes() - (1 << 20)      # 1 MiB slack
    avail = max(budget - fixed_bytes, per_row_bytes * align)
    t = min(max_tile_rows, avail // max(1, per_row_bytes))
    t = max(align, (t // align) * align)
    rows_aligned = _round_up(rows, align)
    if rows_aligned >= 2 * align:                 # keep >= 2 grid steps (megacore)
        t = min(t, max(align, _round_up(pl.cdiv(rows_aligned, 2), align)))
    return int(min(t, rows_aligned))


def _choose_tile_n(n, k, w_itemsize):
    """N tile for the fallback dense1: keep the (double-buffered) weight block
    within ~1/4 of the VMEM budget while staying a multiple of 128 (lane-dense
    stores) and a divisor of n."""
    max_wbytes = max(_vmem_limit_bytes() // 4, 2 * k * 256 * w_itemsize)
    tile_n = n
    while (tile_n % 2 == 0 and tile_n // 2 >= 256 and (tile_n // 2) % 128 == 0
           and 2 * k * tile_n * w_itemsize > max_wbytes):
        tile_n //= 2
    return tile_n


# ----------------------------------------------------------------------------
# In-kernel math helpers
# ----------------------------------------------------------------------------
_ERF_P = 0.3275911
_ERF_A1 = 0.254829592
_ERF_A2 = -0.284496736
_ERF_A3 = 1.421413741
_ERF_A4 = -1.453152027
_ERF_A5 = 1.061405429
_INV_SQRT2 = 1.0 / math.sqrt(2.0)


def _erf_f32(x):
    """Abramowitz-Stegun 7.1.26 erf approximation, |err| < 1.5e-7.

    Built only from exp/mul/add/div/select so it always lowers in Mosaic
    (exp runs on the EUP slot, essentially free underneath the MXU work).
    """
    a = jnp.abs(x)
    t = 1.0 / (1.0 + _ERF_P * a)
    poly = ((((_ERF_A5 * t + _ERF_A4) * t + _ERF_A3) * t + _ERF_A2) * t
            + _ERF_A1) * t
    e = 1.0 - poly * jnp.exp(-a * a)
    return jnp.where(x < 0, -e, e)


def _gelu_f32(x):
    # exact erf-GELU matching the reference module's `gelu` (error < ~1e-6)
    return x * 0.5 * (1.0 + _erf_f32(x * _INV_SQRT2))


def _layernorm_f32(t, g, b, eps, inv_h):
    # One-pass sum / sum-of-squares (halves cross-lane reduction traffic);
    # clamp variance at 0 to avoid rsqrt(negative) NaN from f32 cancellation.
    mean = jnp.sum(t, axis=-1, keepdims=True) * inv_h
    mean_sq = jnp.sum(t * t, axis=-1, keepdims=True) * inv_h
    var = jnp.maximum(mean_sq - mean * mean, 0.0)
    y = (t - mean) * jax.lax.rsqrt(var + eps)
    return g * y + b


# ----------------------------------------------------------------------------
# Kernels
# ----------------------------------------------------------------------------
def _add_layernorm_kernel(x_ref, r_ref, g_ref, b_ref, o_ref, *, eps, inv_h):
    """o = LayerNorm(x + r) * g + b, normalized over the last (hidden) axis."""
    t = x_ref[...].astype(jnp.float32) + r_ref[...].astype(jnp.float32)
    out = _layernorm_f32(t, g_ref[...].astype(jnp.float32),
                         b_ref[...].astype(jnp.float32), eps, inv_h)
    o_ref[...] = out.astype(o_ref.dtype)


def _ffn_kernel(x_ref, w1_ref, b1_ref, w2_ref, b2_ref, g_ref, beta_ref, o_ref,
                *, eps, inv_h):
    """o = LayerNorm(gelu(x @ w1 + b1) @ w2 + b2 + x) * g + beta.

    x is read once from HBM (both matmul input and residual); the
    (tile_rows, 4H) intermediate lives only in VMEM/vregs.
    """
    x = x_ref[...]
    h = jnp.dot(x, w1_ref[...], preferred_element_type=jnp.float32)
    h = _gelu_f32(h + b1_ref[...].astype(jnp.float32))
    t = jnp.dot(h.astype(w2_ref.dtype), w2_ref[...],
                preferred_element_type=jnp.float32)
    t = t + b2_ref[...].astype(jnp.float32) + x.astype(jnp.float32)
    out = _layernorm_f32(t, g_ref[...].astype(jnp.float32),
                         beta_ref[...].astype(jnp.float32), eps, inv_h)
    o_ref[...] = out.astype(o_ref.dtype)


def _dense_gelu_kernel(x_ref, w_ref, b_ref, o_ref):
    """o = gelu(x @ w + b) -- GELU fused into the matmul epilogue."""
    acc = jnp.dot(x_ref[...], w_ref[...], preferred_element_type=jnp.float32)
    o_ref[...] = _gelu_f32(acc + b_ref[...].astype(jnp.float32)).astype(o_ref.dtype)


def _dense_add_layernorm_kernel(x_ref, w_ref, b_ref, r_ref, g_ref, beta_ref,
                                o_ref, *, eps, inv_h):
    """o = LayerNorm(x @ w + b + r) * g + beta."""
    acc = jnp.dot(x_ref[...], w_ref[...], preferred_element_type=jnp.float32)
    t = acc + b_ref[...].astype(jnp.float32) + r_ref[...].astype(jnp.float32)
    out = _layernorm_f32(t, g_ref[...].astype(jnp.float32),
                         beta_ref[...].astype(jnp.float32), eps, inv_h)
    o_ref[...] = out.astype(o_ref.dtype)


# ----------------------------------------------------------------------------
# Pallas wrappers
# ----------------------------------------------------------------------------
def add_layer_norm(x, residual, gamma, beta, *, eps=1e-12):
    """LayerNorm(x + residual) * gamma + beta over the last axis."""
    shape = x.shape
    hidden = shape[-1]
    rows = math.prod(shape[:-1])
    x2 = x.reshape(rows, hidden)
    r2 = residual.reshape(rows, hidden)
    g2 = gamma.reshape(1, hidden)
    b2 = beta.reshape(1, hidden)

    itemsize = jnp.dtype(x.dtype).itemsize
    # double-buffered x / r / out tiles + ~2 f32 working rows in-kernel
    per_row = 6 * hidden * itemsize + 8 * hidden
    tile_rows = _choose_tile_rows(rows, per_row_bytes=per_row,
                                  fixed_bytes=4 * hidden * itemsize,
                                  itemsize=itemsize)
    grid = (pl.cdiv(rows, tile_rows),)   # ragged last block handled by Pallas

    kernel = functools.partial(_add_layernorm_kernel, eps=eps, inv_h=1.0 / hidden)
    # TODO(synk): pipeline_mode=pl.Buffered(3) on the x/r specs is an optional
    # few-% lever on this pure-bandwidth path; left at the default depth.
    out = pl.pallas_call(
        kernel,
        out_shape=jax.ShapeDtypeStruct((rows, hidden), x.dtype),
        grid_spec=pl.GridSpec(
            grid=grid,
            in_specs=[
                pl.BlockSpec((tile_rows, hidden), lambda i: (i, 0)),
                pl.BlockSpec((tile_rows, hidden), lambda i: (i, 0)),
                pl.BlockSpec((1, hidden), lambda i: (0, 0)),
                pl.BlockSpec((1, hidden), lambda i: (0, 0)),
            ],
            out_specs=pl.BlockSpec((tile_rows, hidden), lambda i: (i, 0)),
        ),
        compiler_params=_compiler_params(1),
    )(x2, r2, g2, b2)
    return out.reshape(shape)


def _ffn_fused(x2, inter, *, eps):
    """Single-pallas_call FFN: dot(w1)+b1 -> gelu -> dot(w2)+b2 + residual -> LN."""
    rows, hidden = x2.shape
    inter_dim = inter["w1"].shape[-1]
    itemsize = jnp.dtype(x2.dtype).itemsize
    w_itemsize = jnp.dtype(inter["w1"].dtype).itemsize

    # resident weights (count 2 buffers) + biases/scales
    fixed = (2 * (hidden * inter_dim + inter_dim * hidden) * w_itemsize
             + 2 * (2 * inter_dim + 3 * hidden) * itemsize)
    # double-buffered x/out tiles + f32 (4H) intermediate + f32 (H) accumulator
    per_row = 4 * hidden * itemsize + 4 * (inter_dim + 2 * hidden)
    tile_rows = _choose_tile_rows(rows, per_row_bytes=per_row,
                                  fixed_bytes=fixed, itemsize=itemsize)
    grid = (pl.cdiv(rows, tile_rows),)

    kernel = functools.partial(_ffn_kernel, eps=eps, inv_h=1.0 / hidden)
    return pl.pallas_call(
        kernel,
        out_shape=jax.ShapeDtypeStruct((rows, hidden), x2.dtype),
        grid_spec=pl.GridSpec(
            grid=grid,
            in_specs=[
                pl.BlockSpec((tile_rows, hidden), lambda i: (i, 0)),
                pl.BlockSpec((hidden, inter_dim), lambda i: (0, 0)),
                pl.BlockSpec((1, inter_dim), lambda i: (0, 0)),
                pl.BlockSpec((inter_dim, hidden), lambda i: (0, 0)),
                pl.BlockSpec((1, hidden), lambda i: (0, 0)),
                pl.BlockSpec((1, hidden), lambda i: (0, 0)),
                pl.BlockSpec((1, hidden), lambda i: (0, 0)),
            ],
            out_specs=pl.BlockSpec((tile_rows, hidden), lambda i: (i, 0)),
        ),
        compiler_params=_compiler_params(1),
    )(x2, inter["w1"], inter["b1"].reshape(1, inter_dim),
      inter["w2"], inter["b2"].reshape(1, hidden),
      inter["ln_gamma"].reshape(1, hidden), inter["ln_beta"].reshape(1, hidden))


def dense_gelu(x2, w, b):
    """y = gelu(x @ w + b); 2-D (rows, N-tiles) parallel grid for large N."""
    rows, k = x2.shape
    n = w.shape[-1]
    itemsize = jnp.dtype(x2.dtype).itemsize
    w_itemsize = jnp.dtype(w.dtype).itemsize

    tile_n = _choose_tile_n(n, k, w_itemsize)
    fixed = 2 * k * tile_n * w_itemsize + 2 * tile_n * itemsize
    per_row = (2 * k + 2 * tile_n) * itemsize + 4 * tile_n   # + f32 accumulator
    tile_rows = _choose_tile_rows(rows, per_row_bytes=per_row,
                                  fixed_bytes=fixed, itemsize=itemsize)
    grid = (pl.cdiv(rows, tile_rows), n // tile_n)

    return pl.pallas_call(
        _dense_gelu_kernel,
        out_shape=jax.ShapeDtypeStruct((rows, n), x2.dtype),
        grid_spec=pl.GridSpec(
            grid=grid,
            in_specs=[
                pl.BlockSpec((tile_rows, k), lambda i, j: (i, 0)),
                pl.BlockSpec((k, tile_n), lambda i, j: (0, j)),
                pl.BlockSpec((1, tile_n), lambda i, j: (0, j)),
            ],
            out_specs=pl.BlockSpec((tile_rows, tile_n), lambda i, j: (i, j)),
        ),
        compiler_params=_compiler_params(2),
    )(x2, w, b.reshape(1, n))


def dense_add_layer_norm(x2, w, b, r2, gamma, beta, *, eps=1e-12):
    """LayerNorm(x @ w + b + residual) * gamma + beta, fused in one kernel."""
    rows, k = x2.shape
    n = w.shape[-1]
    itemsize = jnp.dtype(r2.dtype).itemsize
    w_itemsize = jnp.dtype(w.dtype).itemsize

    fixed = 2 * k * n * w_itemsize + 2 * 3 * n * itemsize
    per_row = (2 * k + 4 * n) * itemsize + 8 * n   # + f32 accumulator / LN temps
    tile_rows = _choose_tile_rows(rows, per_row_bytes=per_row,
                                  fixed_bytes=fixed, itemsize=itemsize)
    grid = (pl.cdiv(rows, tile_rows),)

    kernel = functools.partial(_dense_add_layernorm_kernel, eps=eps, inv_h=1.0 / n)
    return pl.pallas_call(
        kernel,
        out_shape=jax.ShapeDtypeStruct((rows, n), r2.dtype),
        grid_spec=pl.GridSpec(
            grid=grid,
            in_specs=[
                pl.BlockSpec((tile_rows, k), lambda i: (i, 0)),
                pl.BlockSpec((k, n), lambda i: (0, 0)),
                pl.BlockSpec((1, n), lambda i: (0, 0)),
                pl.BlockSpec((tile_rows, n), lambda i: (i, 0)),
                pl.BlockSpec((1, n), lambda i: (0, 0)),
                pl.BlockSpec((1, n), lambda i: (0, 0)),
            ],
            out_specs=pl.BlockSpec((tile_rows, n), lambda i: (i, 0)),
        ),
        compiler_params=_compiler_params(1),
    )(x2, w, b.reshape(1, n), r2, gamma.reshape(1, n), beta.reshape(1, n))


# ----------------------------------------------------------------------------
# Module forward (inference: dropout = identity)
# ----------------------------------------------------------------------------
def filter_layer(x, filt, *, eps=1e-12):
    batch, seq_len, hidden = x.shape
    # TODO(synk): rfft/irfft have no Pallas TPU primitive; computed with jnp.fft.
    xf = jnp.fft.rfft(x, axis=1, norm="ortho")
    w = filt["complex_weight"][..., 0] + 1j * filt["complex_weight"][..., 1]
    y = jnp.fft.irfft(xf * w, n=seq_len, axis=1, norm="ortho").astype(x.dtype)
    # out_dropout is identity in eval mode
    return add_layer_norm(y, x, filt["ln_gamma"], filt["ln_beta"], eps=eps)


def intermediate(x, inter, *, eps=1e-12):
    shape = x.shape
    hidden = shape[-1]
    inter_dim = inter["w1"].shape[-1]
    rows = math.prod(shape[:-1])
    x2 = x.reshape(rows, hidden)

    itemsize = jnp.dtype(x.dtype).itemsize
    w_itemsize = jnp.dtype(inter["w1"].dtype).itemsize
    fixed = 2 * (hidden * inter_dim + inter_dim * hidden) * w_itemsize
    per_row = 4 * hidden * itemsize + 4 * (inter_dim + 2 * hidden)

    if fixed + 64 * per_row + (2 << 20) <= _vmem_limit_bytes():
        # Fully fused FFN: the (rows, 4H) intermediate never touches HBM.
        out2 = _ffn_fused(x2, inter, eps=eps)
    else:
        # Very large hidden: weights won't stay resident (e.g. H>=1024 f32 on
        # v7x's 64 MiB VMEM). GELU-fused dense1 with an N-tiled weight axis,
        # then fused dense2 + residual + LayerNorm.
        # TODO(synk): bf16-resident weights (f32 MXU accumulate) would halve
        # residency and run the v6e/v7x MXU at native rate if the model allows.
        h = dense_gelu(x2, inter["w1"], inter["b1"])
        out2 = dense_add_layer_norm(h, inter["w2"], inter["b2"], x2,
                                    inter["ln_gamma"], inter["ln_beta"], eps=eps)
    return out2.reshape(shape)


def encoder_forward(hidden_states, attention_mask, layer_params,
                    output_all_encoded_layers=True):
    del attention_mask  # unused by FilterLayer/Intermediate (matches the module)
    all_encoder_layers = []
    h = hidden_states
    for p in layer_params:
        h = filter_layer(h, p["filter"])
        h = intermediate(h, p["inter"])
        if output_all_encoded_layers:
            all_encoder_layers.append(h)
    if not output_all_encoded_layers:
        all_encoder_layers.append(h)
    return all_encoder_layers


# ----------------------------------------------------------------------------
# Pure-JAX reference (mirrors the PyTorch math)
# ----------------------------------------------------------------------------
def _ref_layer_norm(x, gamma, beta, eps=1e-12):
    u = jnp.mean(x, axis=-1, keepdims=True)
    s = jnp.mean((x - u) ** 2, axis=-1, keepdims=True)
    return gamma * ((x - u) / jnp.sqrt(s + eps)) + beta


def ref_encoder(x, layer_params):
    outs = []
    h = x
    hi = jax.lax.Precision.HIGHEST
    for p in layer_params:
        seq_len = h.shape[1]
        xf = jnp.fft.rfft(h, axis=1, norm="ortho")
        w = p["filter"]["complex_weight"][..., 0] + 1j * p["filter"]["complex_weight"][..., 1]
        y = jnp.fft.irfft(xf * w, n=seq_len, axis=1, norm="ortho")
        h = _ref_layer_norm(y + h, p["filter"]["ln_gamma"], p["filter"]["ln_beta"])
        t = jnp.einsum("bsh,hm->bsm", h, p["inter"]["w1"], precision=hi) + p["inter"]["b1"]
        t = t * 0.5 * (1.0 + jax.lax.erf(t / math.sqrt(2.0)))
        t = jnp.einsum("bsm,mh->bsh", t, p["inter"]["w2"], precision=hi) + p["inter"]["b2"]
        h = _ref_layer_norm(t + h, p["inter"]["ln_gamma"], p["inter"]["ln_beta"])
        outs.append(h)
    return outs


if __name__ == "__main__":
    batch, seq_len, hidden, num_blocks = 2, 8, 32, 2
    key = jax.random.PRNGKey(0)
    k_x, k_cw, k_w1, k_w2 = jax.random.split(key, 4)

    x = jax.random.normal(k_x, (batch, seq_len, hidden), dtype=jnp.float32)
    attention_mask = jnp.ones((batch, 1, seq_len, seq_len), dtype=jnp.float32)

    layer = {
        "filter": {
            "complex_weight": 0.02 * jax.random.normal(
                k_cw, (1, seq_len // 2 + 1, hidden, 2), dtype=jnp.float32),
            "ln_gamma": jnp.ones((hidden,), jnp.float32),
            "ln_beta": jnp.zeros((hidden,), jnp.float32),
        },
        "inter": {
            "w1": 0.02 * jax.random.normal(k_w1, (hidden, 4 * hidden), jnp.float32),
            "b1": jnp.zeros((4 * hidden,), jnp.float32),
            "w2": 0.02 * jax.random.normal(k_w2, (4 * hidden, hidden), jnp.float32),
            "b2": jnp.zeros((hidden,), jnp.float32),
            "ln_gamma": jnp.ones((hidden,), jnp.float32),
            "ln_beta": jnp.zeros((hidden,), jnp.float32),
        },
    }
    # copy.deepcopy in the PyTorch module -> every block starts from identical params
    layer_params = [layer for _ in range(num_blocks)]

    outs = encoder_forward(x, attention_mask, layer_params,
                           output_all_encoded_layers=True)
    outs = jax.block_until_ready(outs)

    refs = ref_encoder(x, layer_params)
    for o, r in zip(outs, refs):
        assert o.shape == r.shape
        diff = float(jnp.max(jnp.abs(o - r)))
        assert jnp.allclose(o, r, atol=2e-3, rtol=2e-3), f"mismatch, max diff {diff}"

    print("KERNEL_OK")
</pallas_src>

<mosaic_0001>
module attributes {stable_mosaic.version = 11 : i64} {
  func.func @_add_layernorm_kernel(%arg0: i32, %arg1: memref<8x32xf32, #tpu.memory_space<vmem>>, %arg2: memref<8x32xf32, #tpu.memory_space<vmem>>, %arg3: memref<1x32xf32, #tpu.memory_space<vmem>>, %arg4: memref<1x32xf32, #tpu.memory_space<vmem>>, %arg5: memref<8x32xf32, #tpu.memory_space<vmem>>) attributes {dimension_semantics = [#tpu.dimension_semantics<parallel>], iteration_bounds = array<i64: 2>, scalar_prefetch = 0 : i64, scratch_operands = 0 : i64, tpu.core_type = #tpu.core_type<tc>, window_params = [{transform_indices = @transform_0, window_bounds = array<i64: 8, 32>}, {transform_indices = @transform_1, window_bounds = array<i64: 8, 32>}, {pipeline_mode = #tpu.pipeline_mode<synchronous>, transform_indices = @transform_2, window_bounds = array<i64: 1, 32>}, {pipeline_mode = #tpu.pipeline_mode<synchronous>, transform_indices = @transform_3, window_bounds = array<i64: 1, 32>}, {transform_indices = @transform_4, window_bounds = array<i64: 8, 32>}]} {
    %c0 = arith.constant 0 : index
    %c0_0 = arith.constant 0 : index
    %0 = vector.load %arg1[%c0, %c0_0] : memref<8x32xf32, #tpu.memory_space<vmem>>, vector<8x32xf32>
    %c0_1 = arith.constant 0 : index
    %c0_2 = arith.constant 0 : index
    %1 = vector.load %arg2[%c0_1, %c0_2] : memref<8x32xf32, #tpu.memory_space<vmem>>, vector<8x32xf32>
    %2 = arith.addf %0, %1 : vector<8x32xf32>
    %c0_3 = arith.constant 0 : index
    %c0_4 = arith.constant 0 : index
    %3 = vector.load %arg3[%c0_3, %c0_4] : memref<1x32xf32, #tpu.memory_space<vmem>>, vector<1x32xf32>
    %c0_5 = arith.constant 0 : index
    %c0_6 = arith.constant 0 : index
    %4 = vector.load %arg4[%c0_5, %c0_6] : memref<1x32xf32, #tpu.memory_space<vmem>>, vector<1x32xf32>
    %cst = arith.constant dense<0.000000e+00> : vector<8xf32>
    %5 = vector.multi_reduction <add>, %2, %cst [1] : vector<8x32xf32> to vector<8xf32>
    %6 = vector.shape_cast %5 : vector<8xf32> to vector<8x1xf32>
    %cst_7 = arith.constant 3.125000e-02 : f32
    %7 = vector.broadcast %cst_7 : f32 to vector<8x1xf32>
    %8 = arith.mulf %6, %7 : vector<8x1xf32>
    %9 = arith.mulf %2, %2 : vector<8x32xf32>
    %cst_8 = arith.constant dense<0.000000e+00> : vector<8xf32>
    %10 = vector.multi_reduction <add>, %9, %cst_8 [1] : vector<8x32xf32> to vector<8xf32>
    %11 = vector.shape_cast %10 : vector<8xf32> to vector<8x1xf32>
    %cst_9 = arith.constant 3.125000e-02 : f32
    %12 = vector.broadcast %cst_9 : f32 to vector<8x1xf32>
    %13 = arith.mulf %11, %12 : vector<8x1xf32>
    %14 = arith.mulf %8, %8 : vector<8x1xf32>
    %15 = arith.subf %13, %14 : vector<8x1xf32>
    %cst_10 = arith.constant 0.000000e+00 : f32
    %16 = vector.broadcast %cst_10 : f32 to vector<8x1xf32>
    %17 = arith.maximumf %15, %16 : vector<8x1xf32>
    %18 = vector.broadcast %8 : vector<8x1xf32> to vector<8x32xf32>
    %19 = arith.subf %2, %18 : vector<8x32xf32>
    %cst_11 = arith.constant 9.99999996E-13 : f32
    %20 = vector.broadcast %cst_11 : f32 to vector<8x1xf32>
    %21 = arith.addf %17, %20 : vector<8x1xf32>
    %22 = math.rsqrt %21 : vector<8x1xf32>
    %23 = vector.broadcast %22 : vector<8x1xf32> to vector<8x32xf32>
    %24 = arith.mulf %19, %23 : vector<8x32xf32>
    %25 = vector.broadcast %3 : vector<1x32xf32> to vector<8x32xf32>
    %26 = arith.mulf %25, %24 : vector<8x32xf32>
    %27 = vector.broadcast %4 : vector<1x32xf32> to vector<8x32xf32>
    %28 = arith.addf %26, %27 : vector<8x32xf32>
    %c0_12 = arith.constant 0 : index
    %c0_13 = arith.constant 0 : index
    %29 = vector.load %arg5[%c0_12, %c0_13] : memref<8x32xf32, #tpu.memory_space<vmem>>, vector<8x32xf32>
    tpu.vector_store %arg5[%c0_12, %c0_13], %28 {strides = array<i32>} : memref<8x32xf32, #tpu.memory_space<vmem>>, vector<8x32xf32>,
    return
  }
  func.func @transform_0(%arg0: i32) -> (i32, i32) {
    %c0_i32 = arith.constant 0 : i32
    %c0_i32_0 = arith.constant 0 : i32
    return %arg0, %c0_i32 : i32, i32
  }
  func.func @transform_1(%arg0: i32) -> (i32, i32) {
    %c0_i32 = arith.constant 0 : i32
    %c0_i32_0 = arith.constant 0 : i32
    return %arg0, %c0_i32 : i32, i32
  }
  func.func @transform_2(%arg0: i32) -> (i32, i32) {
    %c0_i32 = arith.constant 0 : i32
    %c0_i32_0 = arith.constant 0 : i32
    %c0_i32_1 = arith.constant 0 : i32
    return %c0_i32, %c0_i32_0 : i32, i32
  }
  func.func @transform_3(%arg0: i32) -> (i32, i32) {
    %c0_i32 = arith.constant 0 : i32
    %c0_i32_0 = arith.constant 0 : i32
    %c0_i32_1 = arith.constant 0 : i32
    return %c0_i32, %c0_i32_0 : i32, i32
  }
  func.func @transform_4(%arg0: i32) -> (i32, i32) {
    %c0_i32 = arith.constant 0 : i32
    %c0_i32_0 = arith.constant 0 : i32
    return %arg0, %c0_i32 : i32, i32
  }
}

</mosaic_0001>

<llo_original>
// kernel: tpu_custom_call.1
$region0: #{tpu_custom_call.1}
  #allocation0 [shape = 'u32[]', space=smem, size = 0x4, offset = 0x4, fixed_abs, tag = 'smem constant byte address 0x4 - core index']
  #allocation1 [shape = 'u32[144,128]{1,0:T(1,128)}', space=vmem, size = 0x12000, scoped, tag = 'internal scratch']
  %s0 = inlined_call_operand.hbm [shape: f32[16,32], index: 0, kind: input, shape index: {}]
  %s1 = inlined_call_operand.hbm [shape: f32[16,32], index: 1, kind: input, shape index: {}]
  %s2 = inlined_call_operand.vmem [shape: f32[1,32], index: 2, kind: input, shape index: {}]
  %s3 = inlined_call_operand.vmem [shape: f32[1,32], index: 3, kind: input, shape index: {}]
  %s4 = inlined_call_operand.hbm [shape: f32[16,32], index: 4, kind: output, shape index: {}]
  %s5 = sld [smem:[#allocation0]]
  $region57: #{tpu_custom_call.1} parent=0
    _
  %s7 = ssub.s32 1, %s5
  %s8 = scalar_select 0, %s7, %s5
  $region1: #{tpu_custom_call.1} parent=0
    #allocation2 [shape = 'u8[8192]{0}', space=vmem, size = 0x2000, scoped, tag = 'input window, operand 0']
    #allocation3 [shape = 's32[2]{0}', space=sflag, size = 0x8, scoped, tag = 'scoped memory for tpu_custom_call.1']
    #allocation4 [shape = 's32[2]{0}', space=sflag, size = 0x8, scoped, tag = 'scoped memory for tpu_custom_call.1']
    #allocation5 [shape = 'u8[8192]{0}', space=vmem, size = 0x2000, scoped, tag = 'input window, operand 1']
    #allocation6 [shape = 's32[2]{0}', space=sflag, size = 0x8, scoped, tag = 'scoped memory for tpu_custom_call.1']
    #allocation7 [shape = 'u8[8192]{0}', space=vmem, size = 0x2000, scoped, tag = 'output window, operand 0']
    %9 = vsyncpa [#allocation3], 0
    %s10 = scalar_lea.sflag [#allocation3], 1
    %11 = vsyncpa %s10, 0
    %12 = vsyncpa [#allocation6], 0
    %s13 = scalar_lea.sflag [#allocation6], 1
    %14 = vsyncpa %s13, 0
    %15 = vsyncpa [#allocation4], 0
    %s16 = scalar_lea.sflag [#allocation4], 1
    %17 = vsyncpa %s16, 0
    loop: start=0, step=1, limit=4
    $region2: #{tpu_custom_call.1} parent=1 // loop_pre_header
      _
    $region3: #{tpu_custom_call.1} parent=1 // loop_header
      %s19 = sphi 0, %s23
      %p20 = scmp.ge.s32.totalorder %s19, 4
      %s29 = sphi 0, %s31
      %s32 = sphi 0, %s29
      %s33 = sphi 0, %s32
      %s49 = sphi 0, %s33
      %s55 = sphi 0, %s57
      %s58 = sphi 0, %s55
      %s59 = sphi 0, %s58
      %s75 = sphi 0, %s59
      %s79 = sphi 0, %s79
      %s81 = sphi 0, %s79
      %s82 = sphi 0, %s81
      %s96 = sphi 0, %s82
      %s100 = sphi 0, %s100
      %s102 = sphi 0, %s100
      %s103 = sphi 0, %s102
      %s117 = sphi 0, %s103
      %s123 = sphi 0, %s125
      %s126 = sphi 0, %s123
      %s127 = sphi 0, %s126
      %s143 = sphi 0, %s127
    $region4: #{tpu_custom_call.1} parent=1 // loop_header_branch
      %22 = sbr.rel (%p20) target = $region8
    $region5: #{tpu_custom_call.1} parent=1 // loop_body
      %s24 = ssub.s32 %s19, 1
      %s25 = ssub.s32 %s19, 2
      %s26 = sadd.s32 %s19, 1
      %s27 = ssub.s32 %s19, %s26
      %p28 = scmp.eq.s32.totalorder %s27, 0
      %s30 = sadd.s32 %s29, 1
      %s31 = scalar_select %p28, %s29, %s30
      %p34 = pneg %p28
      %p35 = scmp.eq.s32.totalorder %s19, 1
      %p36 = por %p34, %p35
      %p37 = scmp.ne.s32.totalorder %s29, %s32
      %p38 = scmp.eq.s32.totalorder %s19, 0
      %p39 = por %p37, %p38
      %p40 = scmp.ne.s32.totalorder %s29, %s32
      %p41 = scmp.eq.s32.totalorder %s24, 1
      %p42 = por %p40, %p41
      %p43 = scmp.ne.s32.totalorder %s32, %s33
      %p44 = scmp.eq.s32.totalorder %s24, 0
      %p45 = por %p43, %p44
      %p46 = scmp.ne.s32.totalorder %s32, %s33
      %p47 = scmp.eq.s32.totalorder %s25, 1
      %p48 = por %p46, %p47
      %p50 = scmp.ne.s32.totalorder %s33, %s49
      %p51 = scmp.eq.s32.totalorder %s25, 0
      %p52 = por %p50, %p51
      %s53 = ssub.s32 %s19, %s26
      %p54 = scmp.eq.s32.totalorder %s53, 0
      %s56 = sadd.s32 %s55, 1
      %s57 = scalar_select %p54, %s55, %s56
      %p60 = pneg %p54
      %p61 = scmp.eq.s32.totalorder %s19, 1
      %p62 = por %p60, %p61
      %p63 = scmp.ne.s32.totalorder %s55, %s58
      %p64 = scmp.eq.s32.totalorder %s19, 0
      %p65 = por %p63, %p64
      %p66 = scmp.ne.s32.totalorder %s55, %s58
      %p67 = scmp.eq.s32.totalorder %s24, 1
      %p68 = por %p66, %p67
      %p69 = scmp.ne.s32.totalorder %s58, %s59
      %p70 = scmp.eq.s32.totalorder %s24, 0
      %p71 = por %p69, %p70
      %p72 = scmp.ne.s32.totalorder %s58, %s59
      %p73 = scmp.eq.s32.totalorder %s25, 1
      %p74 = por %p72, %p73
      %p76 = scmp.ne.s32.totalorder %s59, %s75
      %p77 = scmp.eq.s32.totalorder %s25, 0
      %p78 = por %p76, %p77
      %s80 = sadd.s32 %s79, 1
      %p83 = scmp.eq.s32.totalorder %s19, 1
      %p84 = scmp.ne.s32.totalorder %s79, %s81
      %p85 = scmp.eq.s32.totalorder %s19, 0
      %p86 = por %p84, %p85
      %p87 = scmp.ne.s32.totalorder %s79, %s81
      %p88 = scmp.eq.s32.totalorder %s24, 1
      %p89 = por %p87, %p88
      %p90 = scmp.ne.s32.totalorder %s81, %s82
      %p91 = scmp.eq.s32.totalorder %s24, 0
      %p92 = por %p90, %p91
      %p93 = scmp.ne.s32.totalorder %s81, %s82
      %p94 = scmp.eq.s32.totalorder %s25, 1
      %p95 = por %p93, %p94
      %p97 = scmp.ne.s32.totalorder %s82, %s96
      %p98 = scmp.eq.s32.totalorder %s25, 0
      %p99 = por %p97, %p98
      %s101 = sadd.s32 %s100, 1
      %p104 = scmp.eq.s32.totalorder %s19, 1
      %p105 = scmp.ne.s32.totalorder %s100, %s102
      %p106 = scmp.eq.s32.totalorder %s19, 0
      %p107 = por %p105, %p106
      %p108 = scmp.ne.s32.totalorder %s100, %s102
      %p109 = scmp.eq.s32.totalorder %s24, 1
      %p110 = por %p108, %p109
      %p111 = scmp.ne.s32.totalorder %s102, %s103
      %p112 = scmp.eq.s32.totalorder %s24, 0
      %p113 = por %p111, %p112
      %p114 = scmp.ne.s32.totalorder %s102, %s103
      %p115 = scmp.eq.s32.totalorder %s25, 1
      %p116 = por %p114, %p115
      %p118 = scmp.ne.s32.totalorder %s103, %s117
      %p119 = scmp.eq.s32.totalorder %s25, 0
      %p120 = por %p118, %p119
      %s121 = ssub.s32 %s19, %s26
      %p122 = scmp.eq.s32.totalorder %s121, 0
      %s124 = sadd.s32 %s123, 1
      %s125 = scalar_select %p122, %s123, %s124
      %p128 = pneg %p122
      %p129 = scmp.eq.s32.totalorder %s19, 1
      %p130 = por %p128, %p129
      %p131 = scmp.ne.s32.totalorder %s123, %s126
      %p132 = scmp.eq.s32.totalorder %s19, 0
      %p133 = por %p131, %p132
      %p134 = scmp.ne.s32.totalorder %s123, %s126
      %p135 = scmp.eq.s32.totalorder %s24, 1
      %p136 = por %p134, %p135
      %p137 = scmp.ne.s32.totalorder %s126, %s127
      %p138 = scmp.eq.s32.totalorder %s24, 0
      %p139 = por %p137, %p138
      %p140 = scmp.ne.s32.totalorder %s126, %s127
      %p141 = scmp.eq.s32.totalorder %s25, 1
      %p142 = por %p140, %p141
      %p144 = scmp.ne.s32.totalorder %s127, %s143
      %p145 = scmp.eq.s32.totalorder %s25, 0
      %p146 = por %p144, %p145
      %p147 = scmp.le.s32.totalorder 1, %s19
      %p148 = scmp.lt.s32.totalorder %s19, 3
      %p149 = pnand %p147, %p148
      %p150 = pneg %p149
      // Predicated region
      $region9: #{tpu_custom_call.1} parent=5 // pred_check
        _
      $region10: #{tpu_custom_call.1} parent=5 // pred_check_branch
        %152 = sbr.rel (%p149) target = $region12
      $region11: #{tpu_custom_call.1} parent=5 // pred_region
        %s153 = ssub.s32 %s19, 1
        // Predicated region
        $region13: #{tpu_custom_call.1} parent=11 // pred_check
          %p154 = pneg %p92
        $region14: #{tpu_custom_call.1} parent=11 // pred_check_branch
          %156 = sbr.rel (%p154) target = $region16
        $region15: #{tpu_custom_call.1} parent=11 // pred_region
          _
        $region16: #{tpu_custom_call.1} parent=11 // pred_fallthru
          _
        // Predicated region
        $region17: #{tpu_custom_call.1} parent=11 // pred_check
          %p157 = pneg %p113
        $region18: #{tpu_custom_call.1} parent=11 // pred_check_branch
          %159 = sbr.rel (%p157) target = $region20
        $region19: #{tpu_custom_call.1} parent=11 // pred_region
          _
        $region20: #{tpu_custom_call.1} parent=11 // pred_fallthru
          _
      $region12: #{tpu_custom_call.1} parent=5 // pred_fallthru
        _
      %p160 = scmp.lt.s32.totalorder %s19, 2
      // Predicated region
      $region21: #{tpu_custom_call.1} parent=5 // pred_check
        %p161 = pneg %p160
      $region22: #{tpu_custom_call.1} parent=5 // pred_check_branch
        %163 = sbr.rel (%p161) target = $region24
      $region23: #{tpu_custom_call.1} parent=5 // pred_region
        // Predicated region
        $region25: #{tpu_custom_call.1} parent=23 // pred_check
          %p164 = pneg %p39
        $region26: #{tpu_custom_call.1} parent=23 // pred_check_branch
          %166 = sbr.rel (%p164) target = $region28
        $region27: #{tpu_custom_call.1} parent=23 // pred_region
          %s167 = sand.u32 %s29, 1
          %s168 = scalar_lea.sflag [#allocation3], %s167
          %s169 = sand.u32 %s29, 1
          %s170 = smul.addr %s169, 8
          %s171 = scalar_lea.vmem [#allocation2], %s170
          %s173 = ssub.s32 128, 128
          %174 = vsyncadd %s168, %s173
          %s175 = smul.addr %s19, 128
          %s176 = scalar_lea.hbm %s0, %s175
          %s178 = sshll.u32 %s171, 4
          %s179 = int_to_ptr.vmem [resolvable:$true] %s178
          %181 = dma.hbm_to_vmem [thread:$0]  %s176, 128, %s179, %s168
        $region28: #{tpu_custom_call.1} parent=23 // pred_fallthru
          _
        // Predicated region
        $region29: #{tpu_custom_call.1} parent=23 // pred_check
          %p182 = pneg %p65
        $region30: #{tpu_custom_call.1} parent=23 // pred_check_branch
          %184 = sbr.rel (%p182) target = $region32
        $region31: #{tpu_custom_call.1} parent=23 // pred_region
          %s185 = sand.u32 %s55, 1
          %s186 = scalar_lea.sflag [#allocation6], %s185
          %s187 = sand.u32 %s55, 1
          %s188 = smul.addr %s187, 8
          %s189 = scalar_lea.vmem [#allocation5], %s188
          %s191 = ssub.s32 128, 128
          %192 = vsyncadd %s186, %s191
          %s193 = smul.addr %s19, 128
          %s194 = scalar_lea.hbm %s1, %s193
          %s196 = sshll.u32 %s189, 4
          %s197 = int_to_ptr.vmem [resolvable:$true] %s196
          %199 = dma.hbm_to_vmem [thread:$0]  %s194, 128, %s197, %s186
        $region32: #{tpu_custom_call.1} parent=23 // pred_fallthru
          _
      $region24: #{tpu_custom_call.1} parent=5 // pred_fallthru
        _
      %p200 = scmp.le.s32.totalorder 1, %s19
      %p201 = scmp.lt.s32.totalorder %s19, 3
      %p202 = pnand %p200, %p201
      %p203 = pneg %p202
      // Predicated region
      $region33: #{tpu_custom_call.1} parent=5 // pred_check
        _
      $region34: #{tpu_custom_call.1} parent=5 // pred_check_branch
        %205 = sbr.rel (%p202) target = $region36
      $region35: #{tpu_custom_call.1} parent=5 // pred_region
        %s206 = ssub.s32 %s19, 1
        %s207 = sand.u32 %s32, 1
        %s208 = scalar_lea.sflag [#allocation3], %s207
        %s209 = sand.u32 %s32, 1
        %s210 = smul.addr %s209, 8
        %s211 = scalar_lea.vmem [#allocation2], %s210
        // Predicated region
        $region37: #{tpu_custom_call.1} parent=35 // pred_check
          %p212 = pneg %p45
        $region38: #{tpu_custom_call.1} parent=35 // pred_check_branch
          %214 = sbr.rel (%p212) target = $region40
        $region39: #{tpu_custom_call.1} parent=35 // pred_region
          %215 = dma.done %s208, 128
        $region40: #{tpu_custom_call.1} parent=35 // pred_fallthru
          _
        %s216 = sand.u32 %s58, 1
        %s217 = scalar_lea.sflag [#allocation6], %s216
        %s218 = sand.u32 %s58, 1
        %s219 = smul.addr %s218, 8
        %s220 = scalar_lea.vmem [#allocation5], %s219
        // Predicated region
        $region41: #{tpu_custom_call.1} parent=35 // pred_check
          %p221 = pneg %p71
        $region42: #{tpu_custom_call.1} parent=35 // pred_check_branch
          %223 = sbr.rel (%p221) target = $region44
        $region43: #{tpu_custom_call.1} parent=35 // pred_region
          %224 = dma.done %s217, 128
        $region44: #{tpu_custom_call.1} parent=35 // pred_fallthru
          _
        %s225 = sand.u32 %s32, 1
        %s226 = scalar_lea.sflag [#allocation3], %s225
        %s227 = sand.u32 %s32, 1
        %s228 = smul.addr %s227, 8
        %s229 = scalar_lea.vmem [#allocation2], %s228
        %p230 = pneg %p45
        %p231 = pneg %p42
        %s232 = sand.u32 %s58, 1
        %s233 = scalar_lea.sflag [#allocation6], %s232
        %s234 = sand.u32 %s58, 1
        %s235 = smul.addr %s234, 8
        %s236 = scalar_lea.vmem [#allocation5], %s235
        %p237 = pneg %p71
        %p238 = pneg %p68
        %p239 = pneg %p92
        %p240 = pneg %p89
        %p241 = pneg %p113
        %p242 = pneg %p110
        %p243 = pneg %p139
        %p244 = pneg %p136
        %s245 = sand.u32 %s126, 1
        %s246 = scalar_lea.sflag [#allocation4], %s245
        %s247 = sand.u32 %s126, 1
        %s248 = smul.addr %s247, 8
        %s249 = scalar_lea.vmem [#allocation7], %s248
        %v250 = vld [vmem:[%s211] sm:$0xff]
        %v251 = vld [vmem:[%s220] sm:$0xff]
        %v252 = vadd.f32 %v250, %v251
        %v253 = vld [vmem:[%s2] sm:$0x1]
        %v254 = vld [vmem:[%s3] sm:$0x1]
        %vm255 = vcmask 261120
        %v256 = vsel %vm255, %v252, 0.0
        %257 = vadd.xlane.f32.xlu0 %v256
        %v258 = vpop.xlane.xlu0 %257
        %v259 = vmul.f32 %v258, 0.03125
        %v260 = vmul.f32 %v252, %v252
        %v261 = vsel %vm255, %v260, 0.0
        %262 = vadd.xlane.f32.xlu0 %v261
        %v263 = vpop.xlane.xlu0 %262
        %v264 = vmul.f32 %v263, 0.03125
        %v265 = vmul.f32 %v259, %v259
        %v266 = vsub.f32 %v264, %v265
        %v267 = vmax.f32 %v266, 0.0
        %v268 = vsub.f32 %v252, %v259
        %v269 = vadd.f32 %v267, 1e-12
        %v270 = vrsqrt.pop %v269
        %v271 = vmul.f32 %v268, %v270
        %v273 = vlaneseq
        %v274 = vshrl.u32 %v273, 7
        %v275 = vsub.s32 0, %v274
        %v276 = vrot.slane %v253, %v275
        %v278 = vmul.f32 %v276, %v271
        %v280 = vlaneseq
        %v281 = vshrl.u32 %v280, 7
        %v282 = vsub.s32 0, %v281
        %v283 = vrot.slane %v254, %v282
        %v285 = vadd.f32 %v278, %v283
        %286 = vst.msk [vmem:[%s249] sm:$0xff] %vm255, %v285
        %s287 = sand.u32 %s126, 1
        %s288 = scalar_lea.sflag [#allocation4], %s287
        %s289 = sand.u32 %s126, 1
        %s290 = smul.addr %s289, 8
        %s291 = scalar_lea.vmem [#allocation7], %s290
        // Predicated region
        $region45: #{tpu_custom_call.1} parent=35 // pred_check
          %p292 = pneg %p136
        $region46: #{tpu_custom_call.1} parent=35 // pred_check_branch
          %294 = sbr.rel (%p292) target = $region48
        $region47: #{tpu_custom_call.1} parent=35 // pred_region
          %s296 = ssub.s32 128, 128
          %297 = vsyncadd %s288, %s296
          %s298 = smul.addr %s24, 128
          %s299 = scalar_lea.hbm %s4, %s298
          %s301 = sshll.u32 %s291, 4
          %s302 = int_to_ptr.vmem [resolvable:$true] %s301
          %304 = dma.vmem_to_hbm [thread:$0]  %s302, 128, %s299, %s288
        $region48: #{tpu_custom_call.1} parent=35 // pred_fallthru
          _
      $region36: #{tpu_custom_call.1} parent=5 // pred_fallthru
        _
      %p305 = scmp.le.s32.totalorder 2, %s19
      // Predicated region
      $region49: #{tpu_custom_call.1} parent=5 // pred_check
        %p306 = pneg %p305
      $region50: #{tpu_custom_call.1} parent=5 // pred_check_branch
        %308 = sbr.rel (%p306) target = $region52
      $region51: #{tpu_custom_call.1} parent=5 // pred_region
        %s309 = ssub.s32 %s19, 2
        // Predicated region
        $region53: #{tpu_custom_call.1} parent=51 // pred_check
          %p310 = pneg %p142
        $region54: #{tpu_custom_call.1} parent=51 // pred_check_branch
          %312 = sbr.rel (%p310) target = $region56
        $region55: #{tpu_custom_call.1} parent=51 // pred_region
          %s313 = sand.u32 %s127, 1
          %s314 = scalar_lea.sflag [#allocation4], %s313
          %s315 = sand.u32 %s127, 1
          %s316 = smul.addr %s315, 8
          %s317 = scalar_lea.vmem [#allocation7], %s316
          %318 = dma.done %s314, 128
        $region56: #{tpu_custom_call.1} parent=51 // pred_fallthru
          _
      $region52: #{tpu_custom_call.1} parent=5 // pred_fallthru
        _
    $region6: #{tpu_custom_call.1} parent=1 // loop_footer
      %s23 = sadd.s32 1, %s19
    $region7: #{tpu_custom_call.1} parent=1 // loop_footer_branch
      %18 = sbr.rel target = $region3
    $region8: #{tpu_custom_call.1} parent=1 // loop_exit
      _
    %319 = vsyncpa [#allocation3], 1
    %s320 = scalar_lea.sflag [#allocation3], 1
    %321 = vsyncpa %s320, 1
    %322 = vsyncpa [#allocation6], 1
    %s323 = scalar_lea.sflag [#allocation6], 1
    %324 = vsyncpa %s323, 1
    %325 = vsyncpa [#allocation4], 1
    %s326 = scalar_lea.sflag [#allocation4], 1
    %327 = vsyncpa %s326, 1

</llo_original>
